<compile_context>
chip_gen: v7x
topology: tpu7x:2x2x1
jax: 0.10.0
libtpu: 0.0.40
codegen_flags: <defaults>
</compile_context>

<pallas_src>
import functools

import jax
import jax.numpy as jnp
from jax import lax
from jax.experimental import pallas as pl
from jax.experimental.pallas import tpu as pltpu

LANE = 128
SUBLANE = 8
TILE_B_CAP = 1024  # x tile: 1024*896*2B ~ 1.75 MiB; well under v7x/v6e/v5e VMEM limits


def _round_up(x, m):
    return ((x + m - 1) // m) * m


def linear_kernel(x_ref, w_ref, b_ref, o_ref):
    # x_ref: (TILE_B, K_pad) bf16  -- flattened input tile
    # w_ref: (N_pad, K_pad)  bf16  -- PyTorch-layout weight (no transpose), grid-resident
    # b_ref: (1, N_pad)      f32   -- zero-padded bias, grid-resident
    # o_ref: (TILE_B, N_pad) f32
    acc = lax.dot_general(
        x_ref[...], w_ref[...],
        dimension_numbers=(((1,), (1,)), ((), ())),   # contract K of x with K of W
        preferred_element_type=jnp.float32,
    )
    o_ref[...] = (acc + b_ref[...]).astype(o_ref.dtype)


@jax.jit
def model_2_3_forward(x_nchw, weight, bias):
    """x_nchw: (B, C, H, W); weight: (num_classes, 784); bias: (num_classes,)."""
    B = x_nchw.shape[0]
    num_classes, in_features = weight.shape

    K_pad = _round_up(in_features, LANE)            # 784 -> 896
    N_pad = _round_up(num_classes, LANE)            # 10  -> 128
    TILE_B = min(TILE_B_CAP, _round_up(B, SUBLANE)) # sublane-aligned batch tile
    B_pad = _round_up(B, TILE_B)

    # Glue (fused under this jit): flatten, pad, cast to bf16.
    x_flat = x_nchw.reshape(B, -1).astype(jnp.float32)
    x_p = jnp.pad(x_flat.astype(jnp.bfloat16),
                  ((0, B_pad - B), (0, K_pad - in_features)))
    w_p = jnp.pad(weight.astype(jnp.bfloat16),
                  ((0, N_pad - num_classes), (0, K_pad - in_features)))
    b_p = jnp.pad(bias.astype(jnp.float32).reshape(1, num_classes),
                  ((0, 0), (0, N_pad - num_classes)))

    grid = (B_pad // TILE_B,)

    out_padded = pl.pallas_call(
        linear_kernel,
        out_shape=jax.ShapeDtypeStruct((B_pad, N_pad), jnp.float32),
        grid_spec=pltpu.PrefetchScalarGridSpec(
            num_scalar_prefetch=0,
            grid=grid,
            in_specs=[
                pl.BlockSpec((TILE_B, K_pad), lambda i: (i, 0)),   # batch-tiled x
                pl.BlockSpec((N_pad, K_pad), lambda i: (0, 0)),    # resident weight
                pl.BlockSpec((1, N_pad), lambda i: (0, 0)),        # resident bias
            ],
            out_specs=pl.BlockSpec((TILE_B, N_pad), lambda i: (i, 0)),
        ),
        compiler_params=pltpu.CompilerParams(
            dimension_semantics=("parallel",),   # batch axis is independent -> 2-TC split on v7x
        ),
    )(x_p, w_p, b_p)

    return out_padded[:B, :num_classes]


if __name__ == "__main__":
    key = jax.random.PRNGKey(0)
    k_x, k_w, k_b = jax.random.split(key, 3)

    B, C, H, W = 2, 1, 28, 28          # MNIST-like, matches 28*28 in_features
    num_classes = 10
    in_features = C * H * W            # 784

    x = jax.random.normal(k_x, (B, C, H, W), dtype=jnp.float32)
    weight = jax.random.normal(k_w, (num_classes, in_features), dtype=jnp.float32) * 0.02
    bias = jax.random.normal(k_b, (num_classes,), dtype=jnp.float32) * 0.02

    out = model_2_3_forward(x, weight, bias)
    out = jax.block_until_ready(out)
    assert out.shape == (B, num_classes)

    # Reference with the same bf16 operand cast (tight tolerance: f32 accumulation).
    xb = x.reshape(B, -1).astype(jnp.bfloat16).astype(jnp.float32)
    wb = weight.astype(jnp.bfloat16).astype(jnp.float32)
    ref_bf16 = xb @ wb.T + bias
    assert jnp.allclose(out, ref_bf16, atol=2e-3, rtol=2e-3)

    # Full-precision reference (loose tolerance due to bf16 input cast).
    ref_f32 = x.reshape(B, -1) @ weight.T + bias
    assert jnp.allclose(out, ref_f32, atol=5e-2, rtol=5e-2)

    print("KERNEL_OK")
</pallas_src>

<mosaic_0001>
module attributes {stable_mosaic.version = 11 : i64} {
  func.func @linear_kernel(%arg0: i32, %arg1: memref<8x896xbf16, #tpu.memory_space<vmem>>, %arg2: memref<128x896xbf16, #tpu.memory_space<vmem>>, %arg3: memref<1x128xf32, #tpu.memory_space<vmem>>, %arg4: memref<8x128xf32, #tpu.memory_space<vmem>>) attributes {dimension_semantics = [#tpu.dimension_semantics<parallel>], iteration_bounds = array<i64: 1>, scalar_prefetch = 0 : i64, scratch_operands = 0 : i64, tpu.core_type = #tpu.core_type<tc>, window_params = [{transform_indices = @transform_0, window_bounds = array<i64: 8, 896>}, {pipeline_mode = #tpu.pipeline_mode<synchronous>, transform_indices = @transform_1, window_bounds = array<i64: 128, 896>}, {pipeline_mode = #tpu.pipeline_mode<synchronous>, transform_indices = @transform_2, window_bounds = array<i64: 1, 128>}, {transform_indices = @transform_3, window_bounds = array<i64: 8, 128>}]} {
    %c0 = arith.constant 0 : index
    %c0_0 = arith.constant 0 : index
    %0 = vector.load %arg1[%c0, %c0_0] : memref<8x896xbf16, #tpu.memory_space<vmem>>, vector<8x896xbf16>
    %c0_1 = arith.constant 0 : index
    %c0_2 = arith.constant 0 : index
    %1 = vector.load %arg2[%c0_1, %c0_2] : memref<128x896xbf16, #tpu.memory_space<vmem>>, vector<128x896xbf16>
    %cst = arith.constant dense<0.000000e+00> : vector<8x128xf32>
    %2 = tpu.matmul %0, %1, %cst {dimension_numbers = #tpu.dot_dimension_numbers<[1], [1], [0], [0], [0, 0, 1, 0], [], []>} : vector<8x896xbf16>, vector<128x896xbf16>, vector<8x128xf32> -> vector<8x128xf32>
    %c0_3 = arith.constant 0 : index
    %c0_4 = arith.constant 0 : index
    %3 = vector.load %arg3[%c0_3, %c0_4] : memref<1x128xf32, #tpu.memory_space<vmem>>, vector<1x128xf32>
    %4 = vector.broadcast %3 : vector<1x128xf32> to vector<8x128xf32>
    %5 = arith.addf %2, %4 : vector<8x128xf32>
    %c0_5 = arith.constant 0 : index
    %c0_6 = arith.constant 0 : index
    %6 = vector.load %arg4[%c0_5, %c0_6] : memref<8x128xf32, #tpu.memory_space<vmem>>, vector<8x128xf32>
    tpu.vector_store %arg4[%c0_5, %c0_6], %5 {strides = array<i32>} : memref<8x128xf32, #tpu.memory_space<vmem>>, vector<8x128xf32>,
    return
  }
  func.func @transform_0(%arg0: i32) -> (i32, i32) {
    %c0_i32 = arith.constant 0 : i32
    %c0_i32_0 = arith.constant 0 : i32
    return %arg0, %c0_i32 : i32, i32
  }
  func.func @transform_1(%arg0: i32) -> (i32, i32) {
    %c0_i32 = arith.constant 0 : i32
    %c0_i32_0 = arith.constant 0 : i32
    %c0_i32_1 = arith.constant 0 : i32
    return %c0_i32, %c0_i32_0 : i32, i32
  }
  func.func @transform_2(%arg0: i32) -> (i32, i32) {
    %c0_i32 = arith.constant 0 : i32
    %c0_i32_0 = arith.constant 0 : i32
    %c0_i32_1 = arith.constant 0 : i32
    return %c0_i32, %c0_i32_0 : i32, i32
  }
  func.func @transform_3(%arg0: i32) -> (i32, i32) {
    %c0_i32 = arith.constant 0 : i32
    %c0_i32_0 = arith.constant 0 : i32
    return %arg0, %c0_i32 : i32, i32
  }
}

</mosaic_0001>

<llo_original>
// kernel: model_2_3_forward.1
$region0: #{model_2_3_forward.1}
  #allocation0 [shape = 'u32[]', space=smem, size = 0x4, offset = 0x4, fixed_abs, tag = 'smem constant byte address 0x4 - core index']
  #allocation1 [shape = 'u32[144,128]{1,0:T(1,128)}', space=vmem, size = 0x12000, scoped, tag = 'internal scratch']
  %s0 = inlined_call_operand.vmem [shape: bf16[8,896], index: 0, kind: input, shape index: {}]
  %s1 = inlined_call_operand.vmem [shape: bf16[128,896], index: 1, kind: input, shape index: {}]
  %s2 = inlined_call_operand.vmem [shape: f32[1,128], index: 2, kind: input, shape index: {}]
  %s3 = inlined_call_operand.vmem [shape: f32[8,128], index: 3, kind: output, shape index: {}]
  %s4 = sld [smem:[#allocation0]]
  $region22: #{model_2_3_forward.1} parent=0
    _
  %s6 = ssub.s32 1, %s4
  %s7 = scalar_select 0, %s6, %s4
  // Predicated region
  $region2: #{model_2_3_forward.1} parent=0 // pred_check
    _
  $region3: #{model_2_3_forward.1} parent=0 // pred_check_branch
    %9 = sbr.rel (0) target = $region5
  $region4: #{model_2_3_forward.1} parent=0 // pred_region
    _
  $region5: #{model_2_3_forward.1} parent=0 // pred_fallthru
    _
  // Predicated region
  $region6: #{model_2_3_forward.1} parent=0 // pred_check
    _
  $region7: #{model_2_3_forward.1} parent=0 // pred_check_branch
    %11 = sbr.rel (0) target = $region9
  $region8: #{model_2_3_forward.1} parent=0 // pred_region
    _
  $region9: #{model_2_3_forward.1} parent=0 // pred_fallthru
    _
  // Predicated region
  $region10: #{model_2_3_forward.1} parent=0 // pred_check
    _
  $region11: #{model_2_3_forward.1} parent=0 // pred_check_branch
    %13 = sbr.rel (0) target = $region13
  $region12: #{model_2_3_forward.1} parent=0 // pred_region
    _
  $region13: #{model_2_3_forward.1} parent=0 // pred_fallthru
    _
  %v15 = vld [vmem:[%s0] sm:$0xff]
  %v16 = vld [vmem:[%s0 + $0x8] sm:$0xff]
  %v17 = vld [vmem:[%s0 + $0x10] sm:$0xff]
  %v18 = vld [vmem:[%s0 + $0x18] sm:$0xf]
  %v19 = vld [vmem:[%s1] sm:$0xff]
  %v20 = vld [vmem:[%s1 + $0x8] sm:$0xff]
  %v21 = vld [vmem:[%s1 + $0x10] sm:$0xff]
  %v22 = vld [vmem:[%s1 + $0x18] sm:$0xf]
  %v23 = vld [vmem:[%s1 + $0x1c] sm:$0xff]
  %v24 = vld [vmem:[%s1 + $0x24] sm:$0xff]
  %v25 = vld [vmem:[%s1 + $0x2c] sm:$0xff]
  %v26 = vld [vmem:[%s1 + $0x34] sm:$0xf]
  %v27 = vld [vmem:[%s1 + $0x38] sm:$0xff]
  %v28 = vld [vmem:[%s1 + $0x40] sm:$0xff]
  %v29 = vld [vmem:[%s1 + $0x48] sm:$0xff]
  %v30 = vld [vmem:[%s1 + $0x50] sm:$0xf]
  %v31 = vld [vmem:[%s1 + $0x54] sm:$0xff]
  %v32 = vld [vmem:[%s1 + $0x5c] sm:$0xff]
  %v33 = vld [vmem:[%s1 + $0x64] sm:$0xff]
  %v34 = vld [vmem:[%s1 + $0x6c] sm:$0xf]
  %v35 = vld [vmem:[%s1 + $0x70] sm:$0xff]
  %v36 = vld [vmem:[%s1 + $0x78] sm:$0xff]
  %v37 = vld [vmem:[%s1 + $0x80] sm:$0xff]
  %v38 = vld [vmem:[%s1 + $0x88] sm:$0xf]
  %v39 = vld [vmem:[%s1 + $0x8c] sm:$0xff]
  %v40 = vld [vmem:[%s1 + $0x94] sm:$0xff]
  %v41 = vld [vmem:[%s1 + $0x9c] sm:$0xff]
  %v42 = vld [vmem:[%s1 + $0xa4] sm:$0xf]
  %v43 = vld [vmem:[%s1 + $0xa8] sm:$0xff]
  %v44 = vld [vmem:[%s1 + $0xb0] sm:$0xff]
  %v45 = vld [vmem:[%s1 + $0xb8] sm:$0xff]
  %v46 = vld [vmem:[%s1 + $0xc0] sm:$0xf]
  %v47 = vld [vmem:[%s1 + $0xc4] sm:$0xff]
  %v48 = vld [vmem:[%s1 + $0xcc] sm:$0xff]
  %v49 = vld [vmem:[%s1 + $0xd4] sm:$0xff]
  %v50 = vld [vmem:[%s1 + $0xdc] sm:$0xf]
  %v51 = vld [vmem:[%s1 + $0xe0] sm:$0xff]
  %v52 = vld [vmem:[%s1 + $0xe8] sm:$0xff]
  %v53 = vld [vmem:[%s1 + $0xf0] sm:$0xff]
  %v54 = vld [vmem:[%s1 + $0xf8] sm:$0xf]
  %v55 = vld [vmem:[%s1 + $0xfc] sm:$0xff]
  %v56 = vld [vmem:[%s1 + $0x104] sm:$0xff]
  %v57 = vld [vmem:[%s1 + $0x10c] sm:$0xff]
  %v58 = vld [vmem:[%s1 + $0x114] sm:$0xf]
  %v59 = vld [vmem:[%s1 + $0x118] sm:$0xff]
  %v60 = vld [vmem:[%s1 + $0x120] sm:$0xff]
  %v61 = vld [vmem:[%s1 + $0x128] sm:$0xff]
  %v62 = vld [vmem:[%s1 + $0x130] sm:$0xf]
  %v63 = vld [vmem:[%s1 + $0x134] sm:$0xff]
  %v64 = vld [vmem:[%s1 + $0x13c] sm:$0xff]
  %v65 = vld [vmem:[%s1 + $0x144] sm:$0xff]
  %v66 = vld [vmem:[%s1 + $0x14c] sm:$0xf]
  %v67 = vld [vmem:[%s1 + $0x150] sm:$0xff]
  %v68 = vld [vmem:[%s1 + $0x158] sm:$0xff]
  %v69 = vld [vmem:[%s1 + $0x160] sm:$0xff]
  %v70 = vld [vmem:[%s1 + $0x168] sm:$0xf]
  %v71 = vld [vmem:[%s1 + $0x16c] sm:$0xff]
  %v72 = vld [vmem:[%s1 + $0x174] sm:$0xff]
  %v73 = vld [vmem:[%s1 + $0x17c] sm:$0xff]
  %v74 = vld [vmem:[%s1 + $0x184] sm:$0xf]
  %v75 = vld [vmem:[%s1 + $0x188] sm:$0xff]
  %v76 = vld [vmem:[%s1 + $0x190] sm:$0xff]
  %v77 = vld [vmem:[%s1 + $0x198] sm:$0xff]
  %v78 = vld [vmem:[%s1 + $0x1a0] sm:$0xf]
  %v79 = vld [vmem:[%s1 + $0x1a4] sm:$0xff]
  %v80 = vld [vmem:[%s1 + $0x1ac] sm:$0xff]
  %v81 = vld [vmem:[%s1 + $0x1b4] sm:$0xff]
  %v82 = vld [vmem:[%s1 + $0x1bc] sm:$0xf]
  %v83 = vld [vmem:[%s2] sm:$0x1]
  %v85 = vlaneseq
  %v86 = vshrl.u32 %v85, 7
  %v87 = vsub.s32 0, %v86
  %v88 = vrot.slane %v83, %v87
  %v94 = vunpack.c.l.b16 %v15
  %v95 = vunpack.c.h.b16 %v15
  %v96 = vunpack.c.l.b16 %v16
  %v97 = vunpack.c.h.b16 %v16
  %v98 = vunpack.c.l.b16 %v17
  %v99 = vunpack.c.h.b16 %v17
  %v100 = vunpack.c.l.b16 %v18
  %v101 = vpack.c.b16 %v94, %v94
  %v102 = vpack.c.b16 %v95, %v95
  %v103 = vpack.c.b16 %v96, %v96
  %v104 = vpack.c.b16 %v97, %v97
  %v105 = vpack.c.b16 %v98, %v98
  %v106 = vpack.c.b16 %v99, %v99
  %v107 = vpack.c.b16 %v100, %v100
  %v179 = vunpack.c.l.b16 %v19
  %v180 = vunpack.c.h.b16 %v19
  %v181 = vunpack.c.l.b16 %v20
  %v182 = vunpack.c.h.b16 %v20
  %v183 = vunpack.c.l.b16 %v21
  %v184 = vunpack.c.h.b16 %v21
  %v185 = vunpack.c.l.b16 %v22
  %v186 = vunpack.c.l.b16 %v23
  %v187 = vunpack.c.h.b16 %v23
  %v188 = vunpack.c.l.b16 %v24
  %v189 = vunpack.c.h.b16 %v24
  %v190 = vunpack.c.l.b16 %v25
  %v191 = vunpack.c.h.b16 %v25
  %v192 = vunpack.c.l.b16 %v26
  %v193 = vunpack.c.l.b16 %v27
  %v194 = vunpack.c.h.b16 %v27
  %v195 = vunpack.c.l.b16 %v28
  %v196 = vunpack.c.h.b16 %v28
  %v197 = vunpack.c.l.b16 %v29
  %v198 = vunpack.c.h.b16 %v29
  %v199 = vunpack.c.l.b16 %v30
  %v200 = vunpack.c.l.b16 %v31
  %v201 = vunpack.c.h.b16 %v31
  %v202 = vunpack.c.l.b16 %v32
  %v203 = vunpack.c.h.b16 %v32
  %v204 = vunpack.c.l.b16 %v33
  %v205 = vunpack.c.h.b16 %v33
  %v206 = vunpack.c.l.b16 %v34
  %v207 = vunpack.c.l.b16 %v35
  %v208 = vunpack.c.h.b16 %v35
  %v209 = vunpack.c.l.b16 %v36
  %v210 = vunpack.c.h.b16 %v36
  %v211 = vunpack.c.l.b16 %v37
  %v212 = vunpack.c.h.b16 %v37
  %v213 = vunpack.c.l.b16 %v38
  %v214 = vunpack.c.l.b16 %v39
  %v215 = vunpack.c.h.b16 %v39
  %v216 = vunpack.c.l.b16 %v40
  %v217 = vunpack.c.h.b16 %v40
  %v218 = vunpack.c.l.b16 %v41
  %v219 = vunpack.c.h.b16 %v41
  %v220 = vunpack.c.l.b16 %v42
  %v221 = vunpack.c.l.b16 %v43
  %v222 = vunpack.c.h.b16 %v43
  %v223 = vunpack.c.l.b16 %v44
  %v224 = vunpack.c.h.b16 %v44
  %v225 = vunpack.c.l.b16 %v45
  %v226 = vunpack.c.h.b16 %v45
  %v227 = vunpack.c.l.b16 %v46
  %v228 = vunpack.c.l.b16 %v47
  %v229 = vunpack.c.h.b16 %v47
  %v230 = vunpack.c.l.b16 %v48
  %v231 = vunpack.c.h.b16 %v48
  %v232 = vunpack.c.l.b16 %v49
  %v233 = vunpack.c.h.b16 %v49
  %v234 = vunpack.c.l.b16 %v50
  %v235 = vunpack.c.l.b16 %v51
  %v236 = vunpack.c.h.b16 %v51
  %v237 = vunpack.c.l.b16 %v52
  %v238 = vunpack.c.h.b16 %v52
  %v239 = vunpack.c.l.b16 %v53
  %v240 = vunpack.c.h.b16 %v53
  %v241 = vunpack.c.l.b16 %v54
  %v242 = vunpack.c.l.b16 %v55
  %v243 = vunpack.c.h.b16 %v55
  %v244 = vunpack.c.l.b16 %v56
  %v245 = vunpack.c.h.b16 %v56
  %v246 = vunpack.c.l.b16 %v57
  %v247 = vunpack.c.h.b16 %v57
  %v248 = vunpack.c.l.b16 %v58
  %v249 = vunpack.c.l.b16 %v59
  %v250 = vunpack.c.h.b16 %v59
  %v251 = vunpack.c.l.b16 %v60
  %v252 = vunpack.c.h.b16 %v60
  %v253 = vunpack.c.l.b16 %v61
  %v254 = vunpack.c.h.b16 %v61
  %v255 = vunpack.c.l.b16 %v62
  %v256 = vunpack.c.l.b16 %v63
  %v257 = vunpack.c.h.b16 %v63
  %v258 = vunpack.c.l.b16 %v64
  %v259 = vunpack.c.h.b16 %v64
  %v260 = vunpack.c.l.b16 %v65
  %v261 = vunpack.c.h.b16 %v65
  %v262 = vunpack.c.l.b16 %v66
  %v263 = vunpack.c.l.b16 %v67
  %v264 = vunpack.c.h.b16 %v67
  %v265 = vunpack.c.l.b16 %v68
  %v266 = vunpack.c.h.b16 %v68
  %v267 = vunpack.c.l.b16 %v69
  %v268 = vunpack.c.h.b16 %v69
  %v269 = vunpack.c.l.b16 %v70
  %v270 = vunpack.c.l.b16 %v71
  %v271 = vunpack.c.h.b16 %v71
  %v272 = vunpack.c.l.b16 %v72
  %v273 = vunpack.c.h.b16 %v72
  %v274 = vunpack.c.l.b16 %v73
  %v275 = vunpack.c.h.b16 %v73
  %v276 = vunpack.c.l.b16 %v74
  %v277 = vunpack.c.l.b16 %v75
  %v278 = vunpack.c.h.b16 %v75
  %v279 = vunpack.c.l.b16 %v76
  %v280 = vunpack.c.h.b16 %v76
  %v281 = vunpack.c.l.b16 %v77
  %v282 = vunpack.c.h.b16 %v77
  %v283 = vunpack.c.l.b16 %v78
  %v284 = vunpack.c.l.b16 %v79
  %v285 = vunpack.c.h.b16 %v79
  %v286 = vunpack.c.l.b16 %v80
  %v287 = vunpack.c.h.b16 %v80
  %v288 = vunpack.c.l.b16 %v81
  %v289 = vunpack.c.h.b16 %v81
  %v290 = vunpack.c.l.b16 %v82
  %v291 = vpack.c.b16 %v186, %v179
  %v292 = vpack.c.b16 %v187, %v180
  %v293 = vpack.c.b16 %v188, %v181
  %v294 = vpack.c.b16 %v189, %v182
  %v295 = vpack.c.b16 %v190, %v183
  %v296 = vpack.c.b16 %v191, %v184
  %v297 = vpack.c.b16 %v192, %v185
  %v298 = vpack.c.b16 %v200, %v193
  %v299 = vpack.c.b16 %v201, %v194
  %v300 = vpack.c.b16 %v202, %v195
  %v301 = vpack.c.b16 %v203, %v196
  %v302 = vpack.c.b16 %v204, %v197
  %v303 = vpack.c.b16 %v205, %v198
  %v304 = vpack.c.b16 %v206, %v199
  %v305 = vpack.c.b16 %v214, %v207
  %v306 = vpack.c.b16 %v215, %v208
  %v307 = vpack.c.b16 %v216, %v209
  %v308 = vpack.c.b16 %v217, %v210
  %v309 = vpack.c.b16 %v218, %v211
  %v310 = vpack.c.b16 %v219, %v212
  %v311 = vpack.c.b16 %v220, %v213
  %v312 = vpack.c.b16 %v228, %v221
  %v313 = vpack.c.b16 %v229, %v222
  %v314 = vpack.c.b16 %v230, %v223
  %v315 = vpack.c.b16 %v231, %v224
  %v316 = vpack.c.b16 %v232, %v225
  %v317 = vpack.c.b16 %v233, %v226
  %v318 = vpack.c.b16 %v234, %v227
  %v319 = vpack.c.b16 %v242, %v235
  %v320 = vpack.c.b16 %v243, %v236
  %v321 = vpack.c.b16 %v244, %v237
  %v322 = vpack.c.b16 %v245, %v238
  %v323 = vpack.c.b16 %v246, %v239
  %v324 = vpack.c.b16 %v247, %v240
  %v325 = vpack.c.b16 %v248, %v241
  %v326 = vpack.c.b16 %v256, %v249
  %v327 = vpack.c.b16 %v257, %v250
  %v328 = vpack.c.b16 %v258, %v251
  %v329 = vpack.c.b16 %v259, %v252
  %v330 = vpack.c.b16 %v260, %v253
  %v331 = vpack.c.b16 %v261, %v254
  %v332 = vpack.c.b16 %v262, %v255
  %v333 = vpack.c.b16 %v270, %v263
  %v334 = vpack.c.b16 %v271, %v264
  %v335 = vpack.c.b16 %v272, %v265
  %v336 = vpack.c.b16 %v273, %v266
  %v337 = vpack.c.b16 %v274, %v267
  %v338 = vpack.c.b16 %v275, %v268
  %v339 = vpack.c.b16 %v276, %v269
  %v340 = vpack.c.b16 %v284, %v277
  %v341 = vpack.c.b16 %v285, %v278
  %v342 = vpack.c.b16 %v286, %v279
  %v343 = vpack.c.b16 %v287, %v280
  %v344 = vpack.c.b16 %v288, %v281
  %v345 = vpack.c.b16 %v289, %v282
  %v346 = vpack.c.b16 %v290, %v283
  %403 = vmatprep.subr.bf16.mxu0 %v292
  %404 = vmatpush1.bf16.xpose.msra.mxu0 %v291
  %405 = vmatprep.subr.bf16.mxu0 %v299
  %406 = vmatpush1.bf16.xpose.msra.mxu0 %v298
  %407 = vmatprep.subr.bf16.mxu0 %v306
  %408 = vmatpush1.bf16.xpose.msra.mxu0 %v305
  %409 = vmatprep.subr.bf16.mxu0 %v313
  %410 = vmatpush1.bf16.xpose.msra.mxu0 %v312
  %411 = vmatprep.subr.bf16.mxu0 %v320
  %412 = vmatpush1.bf16.xpose.msra.mxu0 %v319
  %413 = vmatprep.subr.bf16.mxu0 %v327
  %414 = vmatpush1.bf16.xpose.msra.mxu0 %v326
  %415 = vmatprep.subr.bf16.mxu0 %v334
  %416 = vmatpush1.bf16.xpose.msra.mxu0 %v333
  %417 = vmatprep.subr.bf16.mxu0 %v341
  %418 = vmatpush1.bf16.xpose.msra.mxu0 %v340
  %419 = vmatprep.subr.bf16.mxu0 0
  %420 = vmatpush1.bf16.xpose.msra.mxu0 0
  %421 = vmatprep.subr.bf16.mxu0 0
  %422 = vmatpush1.bf16.xpose.msra.mxu0 0
  %423 = vmatprep.subr.bf16.mxu0 0
  %424 = vmatpush1.bf16.xpose.msra.mxu0 0
  %425 = vmatprep.subr.bf16.mxu0 0
  %426 = vmatpush1.bf16.xpose.msra.mxu0 0
  %427 = vmatprep.subr.bf16.mxu0 0
  %428 = vmatpush1.bf16.xpose.msra.mxu0 0
  %429 = vmatprep.subr.bf16.mxu0 0
  %430 = vmatpush1.bf16.xpose.msra.mxu0 0
  %431 = vmatprep.subr.bf16.mxu0 0
  %432 = vmatpush1.bf16.xpose.msra.mxu0 0
  %433 = vmatprep.subr.bf16.mxu0 0
  %434 = vmatpush1.bf16.xpose.msra.mxu0 0
  %435 = vmatprep.mubr.bf16.mxu0 %v102
  %436 = vmatmul.mubr.bf16.gmra.mrb[0].mxu0 %v101
  %v437 = vpop.f32.mrb[0].mxu0
  %v438 = vadd.f32 %v88, %v437
  %v439 = vpop.f32.mrb[0].mxu0
  %v440 = vpop.f32.mrb[0].mxu0
  %v441 = vpop.f32.mrb[0].mxu0
  %442 = vdwg.mxu0
  %443 = vmatprep.subr.bf16.mxu0 %v294
  %444 = vmatpush1.bf16.xpose.msra.mxu0 %v293
  %445 = vmatprep.subr.bf16.mxu0 %v301
  %446 = vmatpush1.bf16.xpose.msra.mxu0 %v300
  %447 = vmatprep.subr.bf16.mxu0 %v308
  %448 = vmatpush1.bf16.xpose.msra.mxu0 %v307
  %449 = vmatprep.subr.bf16.mxu0 %v315
  %450 = vmatpush1.bf16.xpose.msra.mxu0 %v314
  %451 = vmatprep.subr.bf16.mxu0 %v322
  %452 = vmatpush1.bf16.xpose.msra.mxu0 %v321
  %453 = vmatprep.subr.bf16.mxu0 %v329
  %454 = vmatpush1.bf16.xpose.msra.mxu0 %v328
  %455 = vmatprep.subr.bf16.mxu0 %v336
  %456 = vmatpush1.bf16.xpose.msra.mxu0 %v335
  %457 = vmatprep.subr.bf16.mxu0 %v343
  %458 = vmatpush1.bf16.xpose.msra.mxu0 %v342
  %459 = vmatprep.subr.bf16.mxu0 0
  %460 = vmatpush1.bf16.xpose.msra.mxu0 0
  %461 = vmatprep.subr.bf16.mxu0 0
  %462 = vmatpush1.bf16.xpose.msra.mxu0 0
  %463 = vmatprep.subr.bf16.mxu0 0
  %464 = vmatpush1.bf16.xpose.msra.mxu0 0
  %465 = vmatprep.subr.bf16.mxu0 0
  %466 = vmatpush1.bf16.xpose.msra.mxu0 0
  %467 = vmatprep.subr.bf16.mxu0 0
  %468 = vmatpush1.bf16.xpose.msra.mxu0 0
  %469 = vmatprep.subr.bf16.mxu0 0
  %470 = vmatpush1.bf16.xpose.msra.mxu0 0
  %471 = vmatprep.subr.bf16.mxu0 0
  %472 = vmatpush1.bf16.xpose.msra.mxu0 0
  %473 = vmatprep.subr.bf16.mxu0 0
  %474 = vmatpush1.bf16.xpose.msra.mxu0 0
  %475 = vmatprep.mubr.bf16.mxu0 %v104
  %476 = vmatmul.mubr.bf16.gmra.mrb[0].mxu0 %v103
  %v477 = vpop.f32.mrb[0].mxu0
  %v478 = vadd.f32 %v438, %v477
  %v479 = vpop.f32.mrb[0].mxu0
  %v480 = vpop.f32.mrb[0].mxu0
  %v481 = vpop.f32.mrb[0].mxu0
  %482 = vdwg.mxu0
  %483 = vmatprep.subr.bf16.mxu0 %v296
  %484 = vmatpush1.bf16.xpose.msra.mxu0 %v295
  %485 = vmatprep.subr.bf16.mxu0 %v303
  %486 = vmatpush1.bf16.xpose.msra.mxu0 %v302
  %487 = vmatprep.subr.bf16.mxu0 %v310
  %488 = vmatpush1.bf16.xpose.msra.mxu0 %v309
  %489 = vmatprep.subr.bf16.mxu0 %v317
  %490 = vmatpush1.bf16.xpose.msra.mxu0 %v316
  %491 = vmatprep.subr.bf16.mxu0 %v324
  %492 = vmatpush1.bf16.xpose.msra.mxu0 %v323
  %493 = vmatprep.subr.bf16.mxu0 %v331
  %494 = vmatpush1.bf16.xpose.msra.mxu0 %v330
  %495 = vmatprep.subr.bf16.mxu0 %v338
  %496 = vmatpush1.bf16.xpose.msra.mxu0 %v337
  %497 = vmatprep.subr.bf16.mxu0 %v345
  %498 = vmatpush1.bf16.xpose.msra.mxu0 %v344
  %499 = vmatprep.subr.bf16.mxu0 0
  %500 = vmatpush1.bf16.xpose.msra.mxu0 0
  %501 = vmatprep.subr.bf16.mxu0 0
  %502 = vmatpush1.bf16.xpose.msra.mxu0 0
  %503 = vmatprep.subr.bf16.mxu0 0
  %504 = vmatpush1.bf16.xpose.msra.mxu0 0
  %505 = vmatprep.subr.bf16.mxu0 0
  %506 = vmatpush1.bf16.xpose.msra.mxu0 0
  %507 = vmatprep.subr.bf16.mxu0 0
  %508 = vmatpush1.bf16.xpose.msra.mxu0 0
  %509 = vmatprep.subr.bf16.mxu0 0
  %510 = vmatpush1.bf16.xpose.msra.mxu0 0
  %511 = vmatprep.subr.bf16.mxu0 0
  %512 = vmatpush1.bf16.xpose.msra.mxu0 0
  %513 = vmatprep.subr.bf16.mxu0 0
  %514 = vmatpush1.bf16.xpose.msra.mxu0 0
  %515 = vmatprep.mubr.bf16.mxu0 %v106
  %516 = vmatmul.mubr.bf16.gmra.mrb[0].mxu0 %v105
  %v517 = vpop.f32.mrb[0].mxu0
  %v518 = vadd.f32 %v478, %v517
  %v519 = vpop.f32.mrb[0].mxu0
  %v520 = vpop.f32.mrb[0].mxu0
  %v521 = vpop.f32.mrb[0].mxu0
  %522 = vdwg.mxu0
  %523 = vmatprep.subr.bf16.mxu0 0
  %524 = vmatpush1.bf16.xpose.msra.mxu0 %v297
  %525 = vmatprep.subr.bf16.mxu0 0
  %526 = vmatpush1.bf16.xpose.msra.mxu0 %v304
  %527 = vmatprep.subr.bf16.mxu0 0
  %528 = vmatpush1.bf16.xpose.msra.mxu0 %v311
  %529 = vmatprep.subr.bf16.mxu0 0
  %530 = vmatpush1.bf16.xpose.msra.mxu0 %v318
  %531 = vmatprep.subr.bf16.mxu0 0
  %532 = vmatpush1.bf16.xpose.msra.mxu0 %v325
  %533 = vmatprep.subr.bf16.mxu0 0
  %534 = vmatpush1.bf16.xpose.msra.mxu0 %v332
  %535 = vmatprep.subr.bf16.mxu0 0
  %536 = vmatpush1.bf16.xpose.msra.mxu0 %v339
  %537 = vmatprep.subr.bf16.mxu0 0
  %538 = vmatpush1.bf16.xpose.msra.mxu0 %v346
  %539 = vmatprep.subr.bf16.mxu0 0
  %540 = vmatpush1.bf16.xpose.msra.mxu0 0
  %541 = vmatprep.subr.bf16.mxu0 0
  %542 = vmatpush1.bf16.xpose.msra.mxu0 0
  %543 = vmatprep.subr.bf16.mxu0 0
  %544 = vmatpush1.bf16.xpose.msra.mxu0 0
  %545 = vmatprep.subr.bf16.mxu0 0
  %546 = vmatpush1.bf16.xpose.msra.mxu0 0
  %547 = vmatprep.subr.bf16.mxu0 0
  %548 = vmatpush1.bf16.xpose.msra.mxu0 0
  %549 = vmatprep.subr.bf16.mxu0 0
  %550 = vmatpush1.bf16.xpose.msra.mxu0 0
  %551 = vmatprep.subr.bf16.mxu0 0
  %552 = vmatpush1.bf16.xpose.msra.mxu0 0
  %553 = vmatprep.subr.bf16.mxu0 0
  %554 = vmatpush1.bf16.xpose.msra.mxu0 0
  %555 = vmatprep.mubr.bf16.mxu0 0
  %556 = vmatmul.mubr.bf16.gmra.mrb[0].mxu0 %v107
  %v557 = vpop.f32.mrb[0].mxu0
  %v558 = vadd.f32 %v518, %v557
  %v559 = vpop.f32.mrb[0].mxu0
  %v560 = vpop.f32.mrb[0].mxu0
  %v561 = vpop.f32.mrb[0].mxu0
  %562 = vdwg.mxu0
  %563 = vst [vmem:[%s3] sm:$0xff] %v558
  // Predicated region
  $region14: #{model_2_3_forward.1} parent=0 // pred_check
    _
  $region15: #{model_2_3_forward.1} parent=0 // pred_check_branch
    %565 = sbr.rel (0) target = $region17
  $region16: #{model_2_3_forward.1} parent=0 // pred_region
    _
  $region17: #{model_2_3_forward.1} parent=0 // pred_fallthru
    _
  // Predicated region
  $region18: #{model_2_3_forward.1} parent=0 // pred_check
    _
  $region19: #{model_2_3_forward.1} parent=0 // pred_check_branch
    %567 = sbr.rel (0) target = $region21
  $region20: #{model_2_3_forward.1} parent=0 // pred_region
    _
  $region21: #{model_2_3_forward.1} parent=0 // pred_fallthru
    _

</llo_original>
